<compile_context>
chip_gen: v7x
topology: tpu7x:2x2x1
jax: 0.10.0
libtpu: 0.0.40
codegen_flags: <defaults>
</compile_context>

<pallas_src>
import jax
import jax.numpy as jnp
from jax.experimental import pallas as pl
from jax.experimental.pallas import tpu as pltpu


def conv_swiglu_kernel(x_ref, w12_ref, b12_ref, w3_ref, b3_ref, o_ref):
    # x_ref:   (1, C, T)     activation tile, native dtype, lanes = spatial
    # w12_ref: (2*Chid, C)   [w1^T ; w2^T] stacked along rows -> one fused MXU call
    # b12_ref: (2*Chid, 1)   f32 column biases, same row order
    # w3_ref:  (Cout, Chid)  w3^T (activation dtype)
    # b3_ref:  (Cout, 1)     f32
    # o_ref:   (1, Cout, T)
    chid = w3_ref.shape[1]
    x = x_ref[0]                                            # (C, T), native dtype

    # One MXU call for both gate projections; f32 accumulation.
    h = jnp.dot(w12_ref[...], x, preferred_element_type=jnp.float32) + b12_ref[...]
    h1 = h[:chid]
    h2 = h[chid:]

    # SwiGLU gate in f32 (sigmoid goes to the EUP slot).
    hid = (h1 * jax.nn.sigmoid(h1)) * h2

    # TODO(synk): ffn_ln is nn.Identity (subln=False) and Dropout(p=0.0) is identity; omitted.
    y = jnp.dot(w3_ref[...], hid.astype(w3_ref.dtype),
                preferred_element_type=jnp.float32) + b3_ref[...]
    o_ref[0] = y.astype(o_ref.dtype)


def _round_up(a, b):
    return -(-a // b) * b


def conv_swiglu(x_nchw, w1, b1, w2, b2, w3, b3, *, tile_n=2048):
    """x_nchw: (B, Cin, H, W). w1,w2: (Cin, Chid); w3: (Chid, Cout); biases (1, Chid)/(1, Cout)."""
    B, C, H, W = x_nchw.shape
    Chid = w1.shape[1]
    Cout = w3.shape[1]
    HW = H * W
    act_dtype = x_nchw.dtype
    a_item = jnp.dtype(act_dtype).itemsize

    # --- VMEM budget (per TensorCore): v5e/v6e 128 MiB, v7x 64 MiB -------------------
    try:
        vmem_cap = int(pltpu.get_tpu_info().vmem_capacity_bytes)
    except Exception:
        vmem_cap = 64 * 1024 * 1024          # conservative (v7x) if the query is unavailable
    vmem_limit = int(vmem_cap * 0.75)        # ~48 MiB on v7x, ~96 MiB on v5e/v6e

    # Resident (single-buffered) weights + per-spatial-column cost:
    #   double-buffered x/out blocks (activation dtype) + f32 h/hid/y temporaries.
    w_item = a_item                          # weights are cast to the activation dtype
    weight_bytes = (2 * Chid * C + Chid * Cout) * w_item + (2 * Chid + Cout) * 4
    per_lane = 2 * (C + Cout) * a_item + (3 * Chid + Cout) * 4
    budget = max(vmem_limit - weight_bytes - (4 << 20), 1 << 20)   # Mosaic scratch headroom
    max_tile = max(128, (budget // per_lane) // 128 * 128)

    hw128 = _round_up(HW, 128)
    tile = max(128, min((max(tile_n, 128) // 128) * 128, max_tile, hw128))

    # NCHW is already (B, C, H*W): a reshape, no transpose, no extra HBM pass.
    x = x_nchw.reshape(B, C, HW)
    if HW % 128 != 0 and HW <= tile:
        # Full-extent lane block (exempt from the 128 rule): no pad pass over x and no
        # trailing-slice pass over the output; the tail becomes masked stores.
        tile = HW
        HWp = HW
    else:
        # Make sure both v7x TensorCores get work even when B == 1.
        if B * (-(-HW // tile)) < 2 and tile > 128:
            tile = max(128, (hw128 // 2) // 128 * 128)
        HWp = _round_up(HW, tile)
        if HWp != HW:
            x = jnp.pad(x, ((0, 0), (0, 0), (0, HWp - HW)))

    # Parameter re-layouts: fused gate weight, channels-first orientation, activation
    # dtype for the MXU operands (biases stay f32; accumulation is f32 regardless).
    w12t = jnp.concatenate([w1.T, w2.T], axis=0).astype(act_dtype)            # (2*Chid, C)
    b12t = jnp.concatenate([b1.reshape(Chid, 1), b2.reshape(Chid, 1)],
                           axis=0).astype(jnp.float32)                        # (2*Chid, 1)
    w3t = w3.T.astype(act_dtype)                                              # (Cout, Chid)
    b3t = b3.reshape(Cout, 1).astype(jnp.float32)                             # (Cout, 1)

    grid = (B, HWp // tile)
    cost = pl.CostEstimate(
        flops=2 * B * HWp * Chid * (2 * C + Cout),
        transcendentals=B * HWp * Chid,                                       # SiLU sigmoid
        bytes_accessed=B * HWp * (C + Cout) * a_item + weight_bytes,          # weights once
    )

    def _run(single_buffer_weights):
        wkw = dict(pipeline_mode=pl.Buffered(1)) if single_buffer_weights else {}
        return pl.pallas_call(
            conv_swiglu_kernel,
            out_shape=jax.ShapeDtypeStruct((B, Cout, HWp), act_dtype),
            grid_spec=pltpu.PrefetchScalarGridSpec(
                num_scalar_prefetch=0,
                grid=grid,
                in_specs=[
                    pl.BlockSpec((1, C, tile), lambda b, i: (b, 0, i)),
                    # Grid-invariant weights/biases: constant block index, single buffer.
                    pl.BlockSpec((2 * Chid, C), lambda b, i: (0, 0), **wkw),
                    pl.BlockSpec((2 * Chid, 1), lambda b, i: (0, 0), **wkw),
                    pl.BlockSpec((Cout, Chid), lambda b, i: (0, 0), **wkw),
                    pl.BlockSpec((Cout, 1), lambda b, i: (0, 0), **wkw),
                ],
                out_specs=pl.BlockSpec((1, Cout, tile), lambda b, i: (b, 0, i)),
            ),
            compiler_params=pltpu.CompilerParams(
                dimension_semantics=("parallel", "parallel"),
                vmem_limit_bytes=vmem_limit,
            ),
            cost_estimate=cost,
        )(x, w12t, b12t, w3t, b3t)

    try:
        out = _run(True)
    except Exception:
        # TODO(synk): pipeline_mode=pl.Buffered(1) unsupported on this build; fall back
        # to default double-buffered weight blocks (correctness identical).
        out = _run(False)

    if HWp != HW:
        out = out[:, :, :HW]
    return out.reshape(B, Cout, H, W)


def _reference(x_nchw, w1, b1, w2, b2, w3, b3):
    # pure-JAX reference of the PyTorch forward
    B, C, H, W = x_nchw.shape
    xs = jnp.transpose(x_nchw, (0, 2, 3, 1)).reshape(B * H * W, C).astype(jnp.float32)
    h1 = xs @ w1.astype(jnp.float32) + b1.astype(jnp.float32)
    h2 = xs @ w2.astype(jnp.float32) + b2.astype(jnp.float32)
    hid = jax.nn.silu(h1) * h2
    y = hid @ w3.astype(jnp.float32) + b3.astype(jnp.float32)
    Cout = w3.shape[1]
    return jnp.transpose(y.reshape(B, H, W, Cout), (0, 3, 1, 2)).astype(x_nchw.dtype)


if __name__ == "__main__":
    key = jax.random.PRNGKey(0)
    B, Cin, H, W = 2, 4, 16, 16
    Chid = Cin          # required by the module's `.view(B, C, H, W)`
    Cout = Cin

    k = jax.random.split(key, 7)
    x = jax.random.normal(k[0], (B, Cin, H, W), dtype=jnp.float32)

    # deterministic parameter init; Conv2d 1x1 weight (Cout, Cin, 1, 1) stored as (Cin, Cout)
    scale = 1.0 / jnp.sqrt(Cin)
    w1 = jax.random.normal(k[1], (Cin, Chid), jnp.float32) * scale
    b1 = jax.random.normal(k[2], (1, Chid), jnp.float32) * scale
    w2 = jax.random.normal(k[3], (Cin, Chid), jnp.float32) * scale
    b2 = jax.random.normal(k[4], (1, Chid), jnp.float32) * scale
    w3 = jax.random.normal(k[5], (Chid, Cout), jnp.float32) * (1.0 / jnp.sqrt(Chid))
    b3 = jax.random.normal(k[6], (1, Cout), jnp.float32) * (1.0 / jnp.sqrt(Chid))

    y = conv_swiglu(x, w1, b1, w2, b2, w3, b3)
    y = jax.block_until_ready(y)

    y_ref = _reference(x, w1, b1, w2, b2, w3, b3)
    assert y.shape == (B, Cout, H, W)
    # Tolerance accounts for default TPU MXU matmul precision (f32 operands are
    # bf16-rounded) and the tiny sigmoid-implementation delta between the Pallas
    # kernel (EUP) and the XLA reference; gate math/accumulation are f32 in both.
    assert jnp.allclose(y.astype(jnp.float32), y_ref.astype(jnp.float32),
                        atol=2e-2, rtol=2e-2), "mismatch vs reference"

    print("KERNEL_OK")
</pallas_src>

<mosaic_0001>
module attributes {stable_mosaic.version = 11 : i64} {
  func.func @conv_swiglu_kernel(%arg0: i32, %arg1: i32, %arg2: memref<1x4x256xf32, #tpu.memory_space<vmem>>, %arg3: memref<8x4xf32, #tpu.memory_space<vmem>>, %arg4: memref<8x1xf32, #tpu.memory_space<vmem>>, %arg5: memref<4x4xf32, #tpu.memory_space<vmem>>, %arg6: memref<4x1xf32, #tpu.memory_space<vmem>>, %arg7: memref<1x4x256xf32, #tpu.memory_space<vmem>>) attributes {dimension_semantics = [#tpu.dimension_semantics<parallel>, #tpu.dimension_semantics<parallel>], iteration_bounds = array<i64: 2, 1>, scalar_prefetch = 0 : i64, scratch_operands = 0 : i64, tpu.core_type = #tpu.core_type<tc>, window_params = [{transform_indices = @transform_0, window_bounds = array<i64: 1, 4, 256>}, {pipeline_mode = #tpu.pipeline_mode<synchronous>, transform_indices = @transform_1, window_bounds = array<i64: 8, 4>}, {pipeline_mode = #tpu.pipeline_mode<synchronous>, transform_indices = @transform_2, window_bounds = array<i64: 8, 1>}, {pipeline_mode = #tpu.pipeline_mode<synchronous>, transform_indices = @transform_3, window_bounds = array<i64: 4, 4>}, {pipeline_mode = #tpu.pipeline_mode<synchronous>, transform_indices = @transform_4, window_bounds = array<i64: 4, 1>}, {transform_indices = @transform_5, window_bounds = array<i64: 1, 4, 256>}]} {
    %c0 = arith.constant 0 : index
    %c0_0 = arith.constant 0 : index
    %c0_1 = arith.constant 0 : index
    %0 = vector.load %arg2[%c0, %c0_0, %c0_1] : memref<1x4x256xf32, #tpu.memory_space<vmem>>, vector<1x4x256xf32>
    %1 = vector.shape_cast %0 : vector<1x4x256xf32> to vector<4x256xf32>
    %c0_2 = arith.constant 0 : index
    %c0_3 = arith.constant 0 : index
    %2 = vector.load %arg3[%c0_2, %c0_3] : memref<8x4xf32, #tpu.memory_space<vmem>>, vector<8x4xf32>
    %cst = arith.constant dense<0.000000e+00> : vector<8x256xf32>
    %3 = tpu.matmul %2, %1, %cst {dimension_numbers = #tpu.dot_dimension_numbers<[1], [0], [0], [1], [0, 0, 1, 1], [], []>} : vector<8x4xf32>, vector<4x256xf32>, vector<8x256xf32> -> vector<8x256xf32>
    %c0_4 = arith.constant 0 : index
    %c0_5 = arith.constant 0 : index
    %4 = vector.load %arg4[%c0_4, %c0_5] : memref<8x1xf32, #tpu.memory_space<vmem>>, vector<8x1xf32>
    %5 = vector.broadcast %4 : vector<8x1xf32> to vector<8x256xf32>
    %6 = arith.addf %3, %5 : vector<8x256xf32>
    %7 = vector.extract_strided_slice %6 {offsets = [0, 0], sizes = [4, 256], strides = [1, 1]} : vector<8x256xf32> to vector<4x256xf32>
    %8 = vector.extract_strided_slice %6 {offsets = [4, 0], sizes = [4, 256], strides = [1, 1]} : vector<8x256xf32> to vector<4x256xf32>
    %9 = arith.negf %7 : vector<4x256xf32>
    %10 = math.exp %9 : vector<4x256xf32>
    %cst_6 = arith.constant 1.000000e+00 : f32
    %11 = vector.broadcast %cst_6 : f32 to vector<4x256xf32>
    %12 = arith.addf %11, %10 : vector<4x256xf32>
    %13 = arith.divf %11, %12 : vector<4x256xf32>
    %14 = arith.mulf %7, %13 : vector<4x256xf32>
    %15 = arith.mulf %14, %8 : vector<4x256xf32>
    %c0_7 = arith.constant 0 : index
    %c0_8 = arith.constant 0 : index
    %16 = vector.load %arg5[%c0_7, %c0_8] : memref<4x4xf32, #tpu.memory_space<vmem>>, vector<4x4xf32>
    %cst_9 = arith.constant dense<0.000000e+00> : vector<4x256xf32>
    %17 = tpu.matmul %16, %15, %cst_9 {dimension_numbers = #tpu.dot_dimension_numbers<[1], [0], [0], [1], [0, 0, 1, 1], [], []>} : vector<4x4xf32>, vector<4x256xf32>, vector<4x256xf32> -> vector<4x256xf32>
    %c0_10 = arith.constant 0 : index
    %c0_11 = arith.constant 0 : index
    %18 = vector.load %arg6[%c0_10, %c0_11] : memref<4x1xf32, #tpu.memory_space<vmem>>, vector<4x1xf32>
    %19 = vector.broadcast %18 : vector<4x1xf32> to vector<4x256xf32>
    %20 = arith.addf %17, %19 : vector<4x256xf32>
    %c0_12 = arith.constant 0 : index
    %c0_13 = arith.constant 0 : index
    %c0_14 = arith.constant 0 : index
    %21 = vector.load %arg7[%c0_12, %c0_13, %c0_14] : memref<1x4x256xf32, #tpu.memory_space<vmem>>, vector<1x4x256xf32>
    %22 = vector.shape_cast %21 : vector<1x4x256xf32> to vector<4x256xf32>
    %23 = vector.shape_cast %20 : vector<4x256xf32> to vector<1x4x256xf32>
    tpu.vector_store %arg7[%c0_12, %c0_13, %c0_14], %23 {strides = array<i32>} : memref<1x4x256xf32, #tpu.memory_space<vmem>>, vector<1x4x256xf32>,
    return
  }
  func.func @transform_0(%arg0: i32, %arg1: i32) -> (i32, i32, i32) {
    %c0_i32 = arith.constant 0 : i32
    %c0_i32_0 = arith.constant 0 : i32
    return %arg0, %c0_i32, %arg1 : i32, i32, i32
  }
  func.func @transform_1(%arg0: i32, %arg1: i32) -> (i32, i32) {
    %c0_i32 = arith.constant 0 : i32
    %c0_i32_0 = arith.constant 0 : i32
    %c0_i32_1 = arith.constant 0 : i32
    return %c0_i32, %c0_i32_0 : i32, i32
  }
  func.func @transform_2(%arg0: i32, %arg1: i32) -> (i32, i32) {
    %c0_i32 = arith.constant 0 : i32
    %c0_i32_0 = arith.constant 0 : i32
    %c0_i32_1 = arith.constant 0 : i32
    return %c0_i32, %c0_i32_0 : i32, i32
  }
  func.func @transform_3(%arg0: i32, %arg1: i32) -> (i32, i32) {
    %c0_i32 = arith.constant 0 : i32
    %c0_i32_0 = arith.constant 0 : i32
    %c0_i32_1 = arith.constant 0 : i32
    return %c0_i32, %c0_i32_0 : i32, i32
  }
  func.func @transform_4(%arg0: i32, %arg1: i32) -> (i32, i32) {
    %c0_i32 = arith.constant 0 : i32
    %c0_i32_0 = arith.constant 0 : i32
    %c0_i32_1 = arith.constant 0 : i32
    return %c0_i32, %c0_i32_0 : i32, i32
  }
  func.func @transform_5(%arg0: i32, %arg1: i32) -> (i32, i32, i32) {
    %c0_i32 = arith.constant 0 : i32
    %c0_i32_0 = arith.constant 0 : i32
    return %arg0, %c0_i32, %arg1 : i32, i32, i32
  }
}

module attributes {stable_mosaic.version = 11 : i64} {
  func.func @conv_swiglu_kernel(%arg0: i32, %arg1: i32, %arg2: memref<1x4x256xf32, #tpu.memory_space<vmem>>, %arg3: memref<8x4xf32, #tpu.memory_space<vmem>>, %arg4: memref<8x1xf32, #tpu.memory_space<vmem>>, %arg5: memref<4x4xf32, #tpu.memory_space<vmem>>, %arg6: memref<4x1xf32, #tpu.memory_space<vmem>>, %arg7: memref<1x4x256xf32, #tpu.memory_space<vmem>>) attributes {dimension_semantics = [#tpu.dimension_semantics<parallel>, #tpu.dimension_semantics<parallel>], iteration_bounds = array<i64: 2, 1>, scalar_prefetch = 0 : i64, scratch_operands = 0 : i64, tpu.core_type = #tpu.core_type<tc>, window_params = [{transform_indices = @transform_0, window_bounds = array<i64: 1, 4, 256>}, {pipeline_mode = #tpu.pipeline_mode<synchronous>, transform_indices = @transform_1, window_bounds = array<i64: 8, 4>}, {pipeline_mode = #tpu.pipeline_mode<synchronous>, transform_indices = @transform_2, window_bounds = array<i64: 8, 1>}, {pipeline_mode = #tpu.pipeline_mode<synchronous>, transform_indices = @transform_3, window_bounds = array<i64: 4, 4>}, {pipeline_mode = #tpu.pipeline_mode<synchronous>, transform_indices = @transform_4, window_bounds = array<i64: 4, 1>}, {transform_indices = @transform_5, window_bounds = array<i64: 1, 4, 256>}]} {
    %c0 = arith.constant 0 : index
    %c0_0 = arith.constant 0 : index
    %c0_1 = arith.constant 0 : index
    %0 = vector.load %arg2[%c0, %c0_0, %c0_1] : memref<1x4x256xf32, #tpu.memory_space<vmem>>, vector<1x4x256xf32>
    %1 = vector.shape_cast %0 : vector<1x4x256xf32> to vector<4x256xf32>
    %c0_2 = arith.constant 0 : index
    %c0_3 = arith.constant 0 : index
    %2 = vector.load %arg3[%c0_2, %c0_3] : memref<8x4xf32, #tpu.memory_space<vmem>>, vector<8x4xf32>
    %cst = arith.constant dense<0.000000e+00> : vector<8x256xf32>
    %3 = tpu.matmul %2, %1, %cst {dimension_numbers = #tpu.dot_dimension_numbers<[1], [0], [0], [1], [0, 0, 1, 1], [], []>} : vector<8x4xf32>, vector<4x256xf32>, vector<8x256xf32> -> vector<8x256xf32>
    %c0_4 = arith.constant 0 : index
    %c0_5 = arith.constant 0 : index
    %4 = vector.load %arg4[%c0_4, %c0_5] : memref<8x1xf32, #tpu.memory_space<vmem>>, vector<8x1xf32>
    %5 = vector.broadcast %4 : vector<8x1xf32> to vector<8x256xf32>
    %6 = arith.addf %3, %5 : vector<8x256xf32>
    %7 = vector.extract_strided_slice %6 {offsets = [0, 0], sizes = [4, 256], strides = [1, 1]} : vector<8x256xf32> to vector<4x256xf32>
    %8 = vector.extract_strided_slice %6 {offsets = [4, 0], sizes = [4, 256], strides = [1, 1]} : vector<8x256xf32> to vector<4x256xf32>
    %9 = arith.negf %7 : vector<4x256xf32>
    %10 = math.exp %9 : vector<4x256xf32>
    %cst_6 = arith.constant 1.000000e+00 : f32
    %11 = vector.broadcast %cst_6 : f32 to vector<4x256xf32>
    %12 = arith.addf %11, %10 : vector<4x256xf32>
    %13 = arith.divf %11, %12 : vector<4x256xf32>
    %14 = arith.mulf %7, %13 : vector<4x256xf32>
    %15 = arith.mulf %14, %8 : vector<4x256xf32>
    %c0_7 = arith.constant 0 : index
    %c0_8 = arith.constant 0 : index
    %16 = vector.load %arg5[%c0_7, %c0_8] : memref<4x4xf32, #tpu.memory_space<vmem>>, vector<4x4xf32>
    %cst_9 = arith.constant dense<0.000000e+00> : vector<4x256xf32>
    %17 = tpu.matmul %16, %15, %cst_9 {dimension_numbers = #tpu.dot_dimension_numbers<[1], [0], [0], [1], [0, 0, 1, 1], [], []>} : vector<4x4xf32>, vector<4x256xf32>, vector<4x256xf32> -> vector<4x256xf32>
    %c0_10 = arith.constant 0 : index
    %c0_11 = arith.constant 0 : index
    %18 = vector.load %arg6[%c0_10, %c0_11] : memref<4x1xf32, #tpu.memory_space<vmem>>, vector<4x1xf32>
    %19 = vector.broadcast %18 : vector<4x1xf32> to vector<4x256xf32>
    %20 = arith.addf %17, %19 : vector<4x256xf32>
    %c0_12 = arith.constant 0 : index
    %c0_13 = arith.constant 0 : index
    %c0_14 = arith.constant 0 : index
    %21 = vector.load %arg7[%c0_12, %c0_13, %c0_14] : memref<1x4x256xf32, #tpu.memory_space<vmem>>, vector<1x4x256xf32>
    %22 = vector.shape_cast %21 : vector<1x4x256xf32> to vector<4x256xf32>
    %23 = vector.shape_cast %20 : vector<4x256xf32> to vector<1x4x256xf32>
    tpu.vector_store %arg7[%c0_12, %c0_13, %c0_14], %23 {strides = array<i32>} : memref<1x4x256xf32, #tpu.memory_space<vmem>>, vector<1x4x256xf32>,
    return
  }
  func.func @transform_0(%arg0: i32, %arg1: i32) -> (i32, i32, i32) {
    %c0_i32 = arith.constant 0 : i32
    %c0_i32_0 = arith.constant 0 : i32
    return %arg0, %c0_i32, %arg1 : i32, i32, i32
  }
  func.func @transform_1(%arg0: i32, %arg1: i32) -> (i32, i32) {
    %c0_i32 = arith.constant 0 : i32
    %c0_i32_0 = arith.constant 0 : i32
    %c0_i32_1 = arith.constant 0 : i32
    return %c0_i32, %c0_i32_0 : i32, i32
  }
  func.func @transform_2(%arg0: i32, %arg1: i32) -> (i32, i32) {
    %c0_i32 = arith.constant 0 : i32
    %c0_i32_0 = arith.constant 0 : i32
    %c0_i32_1 = arith.constant 0 : i32
    return %c0_i32, %c0_i32_0 : i32, i32
  }
  func.func @transform_3(%arg0: i32, %arg1: i32) -> (i32, i32) {
    %c0_i32 = arith.constant 0 : i32
    %c0_i32_0 = arith.constant 0 : i32
    %c0_i32_1 = arith.constant 0 : i32
    return %c0_i32, %c0_i32_0 : i32, i32
  }
  func.func @transform_4(%arg0: i32, %arg1: i32) -> (i32, i32) {
    %c0_i32 = arith.constant 0 : i32
    %c0_i32_0 = arith.constant 0 : i32
    %c0_i32_1 = arith.constant 0 : i32
    return %c0_i32, %c0_i32_0 : i32, i32
  }
  func.func @transform_5(%arg0: i32, %arg1: i32) -> (i32, i32, i32) {
    %c0_i32 = arith.constant 0 : i32
    %c0_i32_0 = arith.constant 0 : i32
    return %arg0, %c0_i32, %arg1 : i32, i32, i32
  }
}

</mosaic_0001>

<llo_original>
// kernel: tpu_custom_call.1
$region0: #{tpu_custom_call.1}
  #allocation0 [shape = 'u32[]', space=smem, size = 0x4, offset = 0x4, fixed_abs, tag = 'smem constant byte address 0x4 - core index']
  #allocation1 [shape = 'u32[144,128]{1,0:T(1,128)}', space=vmem, size = 0x12000, scoped, tag = 'internal scratch']
  %s0 = inlined_call_operand.vmem [shape: f32[2,4,256], index: 0, kind: input, shape index: {}]
  %s1 = inlined_call_operand.vmem [shape: f32[8,4], index: 1, kind: input, shape index: {}]
  %s2 = inlined_call_operand.vmem [shape: f32[8,1], index: 2, kind: input, shape index: {}]
  %s3 = inlined_call_operand.vmem [shape: f32[4,4], index: 3, kind: input, shape index: {}]
  %s4 = inlined_call_operand.vmem [shape: f32[4,1], index: 4, kind: input, shape index: {}]
  %s5 = inlined_call_operand.hbm [shape: f32[2,4,256], index: 5, kind: output, shape index: {}]
  %s6 = sld [smem:[#allocation0]]
  $region53: #{tpu_custom_call.1} parent=0
    _
  %s8 = ssub.s32 1, %s6
  %s9 = scalar_select 0, %s8, %s6
  $region1: #{tpu_custom_call.1} parent=0
    #allocation2 [shape = 'u8[8192]{0}', space=vmem, size = 0x2000, scoped, tag = 'output window, operand 0']
    #allocation3 [shape = 's32[2]{0}', space=sflag, size = 0x8, scoped, tag = 'scoped memory for tpu_custom_call.1']
    %10 = vsyncpa [#allocation3], 0
    %s11 = scalar_lea.sflag [#allocation3], 1
    %12 = vsyncpa %s11, 0
    loop: start=0, step=1, limit=4
    $region2: #{tpu_custom_call.1} parent=1 // loop_pre_header
      _
    $region3: #{tpu_custom_call.1} parent=1 // loop_header
      %s14 = sphi 0, %s18
      %p15 = scmp.ge.s32.totalorder %s14, 4
      %s21 = sphi 0, %s33
      %s22 = sphi 0, %s29
      %s23 = sphi 0, %s21
      %s24 = sphi 0, %s22
      %s25 = sphi 0, %s23
      %s26 = sphi 0, %s24
      %s38 = sphi 0, %s40
      %s41 = sphi 0, %s38
      %s42 = sphi 0, %s41
      %s58 = sphi 0, %s42
      %s62 = sphi 0, %s62
      %s64 = sphi 0, %s62
      %s65 = sphi 0, %s64
      %s79 = sphi 0, %s65
      %s83 = sphi 0, %s83
      %s85 = sphi 0, %s83
      %s86 = sphi 0, %s85
      %s100 = sphi 0, %s86
      %s104 = sphi 0, %s104
      %s106 = sphi 0, %s104
      %s107 = sphi 0, %s106
      %s121 = sphi 0, %s107
      %s125 = sphi 0, %s125
      %s127 = sphi 0, %s125
      %s128 = sphi 0, %s127
      %s142 = sphi 0, %s128
      %s150 = sphi 0, %s152
      %s153 = sphi 0, %s150
      %s154 = sphi 0, %s153
      %s170 = sphi 0, %s154
    $region4: #{tpu_custom_call.1} parent=1 // loop_header_branch
      %17 = sbr.rel (%p15) target = $region8
    $region5: #{tpu_custom_call.1} parent=1 // loop_body
      %s19 = ssub.s32 %s14, 1
      %s20 = ssub.s32 %s14, 2
      %s27 = sadd.s32 1, %s22
      %p28 = scmp.ge.s32.totalorder %s27, 1
      %s29 = scalar_select %p28, 0, %s27
      %s30 = sadd.s32 1, %s21
      %s31 = scalar_select %p28, %s30, %s21
      %p32 = scmp.ge.s32.totalorder %s31, 2
      %s33 = scalar_select %p32, 0, %s31
      %s34 = ssub.s32 %s21, %s33
      %s35 = ssub.s32 %s22, %s29
      %s36 = sor.u32 %s34, %s35
      %p37 = scmp.eq.s32.totalorder %s36, 0
      %s39 = sadd.s32 %s38, 1
      %s40 = scalar_select %p37, %s38, %s39
      %p43 = pneg %p37
      %p44 = scmp.eq.s32.totalorder %s14, 1
      %p45 = por %p43, %p44
      %p46 = scmp.ne.s32.totalorder %s38, %s41
      %p47 = scmp.eq.s32.totalorder %s14, 0
      %p48 = por %p46, %p47
      %p49 = scmp.ne.s32.totalorder %s38, %s41
      %p50 = scmp.eq.s32.totalorder %s19, 1
      %p51 = por %p49, %p50
      %p52 = scmp.ne.s32.totalorder %s41, %s42
      %p53 = scmp.eq.s32.totalorder %s19, 0
      %p54 = por %p52, %p53
      %p55 = scmp.ne.s32.totalorder %s41, %s42
      %p56 = scmp.eq.s32.totalorder %s20, 1
      %p57 = por %p55, %p56
      %p59 = scmp.ne.s32.totalorder %s42, %s58
      %p60 = scmp.eq.s32.totalorder %s20, 0
      %p61 = por %p59, %p60
      %s63 = sadd.s32 %s62, 1
      %p66 = scmp.eq.s32.totalorder %s14, 1
      %p67 = scmp.ne.s32.totalorder %s62, %s64
      %p68 = scmp.eq.s32.totalorder %s14, 0
      %p69 = por %p67, %p68
      %p70 = scmp.ne.s32.totalorder %s62, %s64
      %p71 = scmp.eq.s32.totalorder %s19, 1
      %p72 = por %p70, %p71
      %p73 = scmp.ne.s32.totalorder %s64, %s65
      %p74 = scmp.eq.s32.totalorder %s19, 0
      %p75 = por %p73, %p74
      %p76 = scmp.ne.s32.totalorder %s64, %s65
      %p77 = scmp.eq.s32.totalorder %s20, 1
      %p78 = por %p76, %p77
      %p80 = scmp.ne.s32.totalorder %s65, %s79
      %p81 = scmp.eq.s32.totalorder %s20, 0
      %p82 = por %p80, %p81
      %s84 = sadd.s32 %s83, 1
      %p87 = scmp.eq.s32.totalorder %s14, 1
      %p88 = scmp.ne.s32.totalorder %s83, %s85
      %p89 = scmp.eq.s32.totalorder %s14, 0
      %p90 = por %p88, %p89
      %p91 = scmp.ne.s32.totalorder %s83, %s85
      %p92 = scmp.eq.s32.totalorder %s19, 1
      %p93 = por %p91, %p92
      %p94 = scmp.ne.s32.totalorder %s85, %s86
      %p95 = scmp.eq.s32.totalorder %s19, 0
      %p96 = por %p94, %p95
      %p97 = scmp.ne.s32.totalorder %s85, %s86
      %p98 = scmp.eq.s32.totalorder %s20, 1
      %p99 = por %p97, %p98
      %p101 = scmp.ne.s32.totalorder %s86, %s100
      %p102 = scmp.eq.s32.totalorder %s20, 0
      %p103 = por %p101, %p102
      %s105 = sadd.s32 %s104, 1
      %p108 = scmp.eq.s32.totalorder %s14, 1
      %p109 = scmp.ne.s32.totalorder %s104, %s106
      %p110 = scmp.eq.s32.totalorder %s14, 0
      %p111 = por %p109, %p110
      %p112 = scmp.ne.s32.totalorder %s104, %s106
      %p113 = scmp.eq.s32.totalorder %s19, 1
      %p114 = por %p112, %p113
      %p115 = scmp.ne.s32.totalorder %s106, %s107
      %p116 = scmp.eq.s32.totalorder %s19, 0
      %p117 = por %p115, %p116
      %p118 = scmp.ne.s32.totalorder %s106, %s107
      %p119 = scmp.eq.s32.totalorder %s20, 1
      %p120 = por %p118, %p119
      %p122 = scmp.ne.s32.totalorder %s107, %s121
      %p123 = scmp.eq.s32.totalorder %s20, 0
      %p124 = por %p122, %p123
      %s126 = sadd.s32 %s125, 1
      %p129 = scmp.eq.s32.totalorder %s14, 1
      %p130 = scmp.ne.s32.totalorder %s125, %s127
      %p131 = scmp.eq.s32.totalorder %s14, 0
      %p132 = por %p130, %p131
      %p133 = scmp.ne.s32.totalorder %s125, %s127
      %p134 = scmp.eq.s32.totalorder %s19, 1
      %p135 = por %p133, %p134
      %p136 = scmp.ne.s32.totalorder %s127, %s128
      %p137 = scmp.eq.s32.totalorder %s19, 0
      %p138 = por %p136, %p137
      %p139 = scmp.ne.s32.totalorder %s127, %s128
      %p140 = scmp.eq.s32.totalorder %s20, 1
      %p141 = por %p139, %p140
      %p143 = scmp.ne.s32.totalorder %s128, %s142
      %p144 = scmp.eq.s32.totalorder %s20, 0
      %p145 = por %p143, %p144
      %s146 = ssub.s32 %s21, %s33
      %s147 = ssub.s32 %s22, %s29
      %s148 = sor.u32 %s146, %s147
      %p149 = scmp.eq.s32.totalorder %s148, 0
      %s151 = sadd.s32 %s150, 1
      %s152 = scalar_select %p149, %s150, %s151
      %p155 = pneg %p149
      %p156 = scmp.eq.s32.totalorder %s14, 1
      %p157 = por %p155, %p156
      %p158 = scmp.ne.s32.totalorder %s150, %s153
      %p159 = scmp.eq.s32.totalorder %s14, 0
      %p160 = por %p158, %p159
      %p161 = scmp.ne.s32.totalorder %s150, %s153
      %p162 = scmp.eq.s32.totalorder %s19, 1
      %p163 = por %p161, %p162
      %p164 = scmp.ne.s32.totalorder %s153, %s154
      %p165 = scmp.eq.s32.totalorder %s19, 0
      %p166 = por %p164, %p165
      %p167 = scmp.ne.s32.totalorder %s153, %s154
      %p168 = scmp.eq.s32.totalorder %s20, 1
      %p169 = por %p167, %p168
      %p171 = scmp.ne.s32.totalorder %s154, %s170
      %p172 = scmp.eq.s32.totalorder %s20, 0
      %p173 = por %p171, %p172
      %p174 = scmp.le.s32.totalorder 1, %s14
      %p175 = scmp.lt.s32.totalorder %s14, 3
      %p176 = pnand %p174, %p175
      %p177 = pneg %p176
      // Predicated region
      $region9: #{tpu_custom_call.1} parent=5 // pred_check
        _
      $region10: #{tpu_custom_call.1} parent=5 // pred_check_branch
        %179 = sbr.rel (%p176) target = $region12
      $region11: #{tpu_custom_call.1} parent=5 // pred_region
        %s180 = ssub.s32 %s14, 1
        // Predicated region
        $region13: #{tpu_custom_call.1} parent=11 // pred_check
          %p181 = pneg %p75
        $region14: #{tpu_custom_call.1} parent=11 // pred_check_branch
          %183 = sbr.rel (%p181) target = $region16
        $region15: #{tpu_custom_call.1} parent=11 // pred_region
          _
        $region16: #{tpu_custom_call.1} parent=11 // pred_fallthru
          _
        // Predicated region
        $region17: #{tpu_custom_call.1} parent=11 // pred_check
          %p184 = pneg %p96
        $region18: #{tpu_custom_call.1} parent=11 // pred_check_branch
          %186 = sbr.rel (%p184) target = $region20
        $region19: #{tpu_custom_call.1} parent=11 // pred_region
          _
        $region20: #{tpu_custom_call.1} parent=11 // pred_fallthru
          _
        // Predicated region
        $region21: #{tpu_custom_call.1} parent=11 // pred_check
          %p187 = pneg %p117
        $region22: #{tpu_custom_call.1} parent=11 // pred_check_branch
          %189 = sbr.rel (%p187) target = $region24
        $region23: #{tpu_custom_call.1} parent=11 // pred_region
          _
        $region24: #{tpu_custom_call.1} parent=11 // pred_fallthru
          _
        // Predicated region
        $region25: #{tpu_custom_call.1} parent=11 // pred_check
          %p190 = pneg %p138
        $region26: #{tpu_custom_call.1} parent=11 // pred_check_branch
          %192 = sbr.rel (%p190) target = $region28
        $region27: #{tpu_custom_call.1} parent=11 // pred_region
          _
        $region28: #{tpu_custom_call.1} parent=11 // pred_fallthru
          _
      $region12: #{tpu_custom_call.1} parent=5 // pred_fallthru
        _
      %p193 = scmp.lt.s32.totalorder %s14, 2
      // Predicated region
      $region29: #{tpu_custom_call.1} parent=5 // pred_check
        %p194 = pneg %p193
      $region30: #{tpu_custom_call.1} parent=5 // pred_check_branch
        %196 = sbr.rel (%p194) target = $region32
      $region31: #{tpu_custom_call.1} parent=5 // pred_region
        // Predicated region
        $region33: #{tpu_custom_call.1} parent=31 // pred_check
          %p197 = pneg %p48
        $region34: #{tpu_custom_call.1} parent=31 // pred_check_branch
          %199 = sbr.rel (%p197) target = $region36
        $region35: #{tpu_custom_call.1} parent=31 // pred_region
          %s200 = smul.u32 2, %s22
          %p201 = scmp.lt.s32.totalorder %s21, 1
          %s202 = scalar_select %p201, %s21, 1
          %p203 = scmp.lt.s32.totalorder %s200, 1
          %s204 = scalar_select %p203, %s200, 1
          %s205 = smul.addr %s202, 2
          %s206 = sadd.s32 %s204, %s205
          %s207 = smul.addr %s206, 4
          %s208 = scalar_lea.vmem %s0, %s207
          %s209 = smul.u32 2, %s22
        $region36: #{tpu_custom_call.1} parent=31 // pred_fallthru
          _
      $region32: #{tpu_custom_call.1} parent=5 // pred_fallthru
        _
      %p210 = scmp.le.s32.totalorder 1, %s14
      %p211 = scmp.lt.s32.totalorder %s14, 3
      %p212 = pnand %p210, %p211
      %p213 = pneg %p212
      // Predicated region
      $region37: #{tpu_custom_call.1} parent=5 // pred_check
        _
      $region38: #{tpu_custom_call.1} parent=5 // pred_check_branch
        %215 = sbr.rel (%p212) target = $region40
      $region39: #{tpu_custom_call.1} parent=5 // pred_region
        %s216 = ssub.s32 %s14, 1
        %s217 = smul.u32 2, %s24
        %p218 = scmp.lt.s32.totalorder %s23, 1
        %s219 = scalar_select %p218, %s23, 1
        %p220 = scmp.lt.s32.totalorder %s217, 1
        %s221 = scalar_select %p220, %s217, 1
        %s222 = smul.addr %s219, 2
        %s223 = sadd.s32 %s221, %s222
        %s224 = smul.addr %s223, 4
        %s225 = scalar_lea.vmem %s0, %s224
        %p226 = pneg %p54
        %p227 = pneg %p51
        %p228 = pneg %p75
        %p229 = pneg %p72
        %p230 = pneg %p96
        %p231 = pneg %p93
        %p232 = pneg %p117
        %p233 = pneg %p114
        %p234 = pneg %p138
        %p235 = pneg %p135
        %p236 = pneg %p166
        %p237 = pneg %p163
        %s238 = sand.u32 %s153, 1
        %s239 = scalar_lea.sflag [#allocation3], %s238
        %s240 = sand.u32 %s153, 1
        %s241 = smul.addr %s240, 8
        %s242 = scalar_lea.vmem [#allocation2], %s241
        %s243 = smul.u32 2, %s24
        %p244 = scmp.lt.s32.totalorder %s23, 1
        %s245 = scalar_select %p244, %s23, 1
        %p246 = scmp.lt.s32.totalorder %s243, 1
        %s247 = scalar_select %p246, %s243, 1
        %s248 = smul.addr %s245, 2
        %s249 = sadd.s32 %s247, %s248
        %s250 = smul.addr %s249, 4
        %s251 = scalar_lea.vmem %s0, %s250
        %s252 = smul.u32 2, %s24
        %s253 = smul.u32 2, %s24
        %v254 = vld [vmem:[%s251] sm:$0xff]
        %v255 = vld [vmem:[%s1] sm:$0xff]
        %v256 = vld [vmem:[%s2] sm:$0xff]
        %258 = vset.pattern.permute.xlu0 0
        %259 = vperm.xlu0 %258, %v256
        %v260 = vpop.permute.xlu0 %259
        %v263 = vcombine.high %v254, %v254
        %vm264 = vcmask 31744
        %v266 = vsel %vm264, %v255, 0
        %vm268 = vcmask 1043456
        %v269 = vsel %vm268, %v254, 0
        %v271 = vsel %vm268, %v263, 0
        %273 = vmatprep.subr.mxu0 %v271
        %274 = vmatpush1.msra.mxu0 %v269
        %275 = vmatprep.subr.mxu0 0.0
        %276 = vmatpush1.msra.mxu0 0.0
        %277 = vmatprep.subr.mxu0 0.0
        %278 = vmatpush1.msra.mxu0 0.0
        %279 = vmatprep.subr.mxu0 0.0
        %280 = vmatpush1.msra.mxu0 0.0
        %281 = vmatprep.subr.mxu0 0.0
        %282 = vmatpush1.msra.mxu0 0.0
        %283 = vmatprep.subr.mxu0 0.0
        %284 = vmatpush1.msra.mxu0 0.0
        %285 = vmatprep.subr.mxu0 0.0
        %286 = vmatpush1.msra.mxu0 0.0
        %287 = vmatprep.subr.mxu0 0.0
        %288 = vmatpush1.msra.mxu0 0.0
        %289 = vmatprep.subr.mxu0 0.0
        %290 = vmatpush1.msra.mxu0 0.0
        %291 = vmatprep.subr.mxu0 0.0
        %292 = vmatpush1.msra.mxu0 0.0
        %293 = vmatprep.subr.mxu0 0.0
        %294 = vmatpush1.msra.mxu0 0.0
        %295 = vmatprep.subr.mxu0 0.0
        %296 = vmatpush1.msra.mxu0 0.0
        %297 = vmatprep.subr.mxu0 0.0
        %298 = vmatpush1.msra.mxu0 0.0
        %299 = vmatprep.subr.mxu0 0.0
        %300 = vmatpush1.msra.mxu0 0.0
        %301 = vmatprep.subr.mxu0 0.0
        %302 = vmatpush1.msra.mxu0 0.0
        %303 = vmatprep.subr.mxu0 0.0
        %304 = vmatpush1.msra.mxu0 0.0
        %305 = vmatprep.subr.mxu0 0.0
        %306 = vmatpush1.msra.mxu0 0.0
        %307 = vmatprep.subr.mxu0 0.0
        %308 = vmatpush1.msra.mxu0 0.0
        %309 = vmatprep.subr.mxu0 0.0
        %310 = vmatpush1.msra.mxu0 0.0
        %311 = vmatprep.subr.mxu0 0.0
        %312 = vmatpush1.msra.mxu0 0.0
        %313 = vmatprep.subr.mxu0 0.0
        %314 = vmatpush1.msra.mxu0 0.0
        %315 = vmatprep.subr.mxu0 0.0
        %316 = vmatpush1.msra.mxu0 0.0
        %317 = vmatprep.subr.mxu0 0.0
        %318 = vmatpush1.msra.mxu0 0.0
        %319 = vmatprep.subr.mxu0 0.0
        %320 = vmatpush1.msra.mxu0 0.0
        %321 = vmatprep.subr.mxu0 0.0
        %322 = vmatpush1.msra.mxu0 0.0
        %323 = vmatprep.subr.mxu0 0.0
        %324 = vmatpush1.msra.mxu0 0.0
        %325 = vmatprep.subr.mxu0 0.0
        %326 = vmatpush1.msra.mxu0 0.0
        %327 = vmatprep.subr.mxu0 0.0
        %328 = vmatpush1.msra.mxu0 0.0
        %329 = vmatprep.subr.mxu0 0.0
        %330 = vmatpush1.msra.mxu0 0.0
        %331 = vmatprep.subr.mxu0 0.0
        %332 = vmatpush1.msra.mxu0 0.0
        %333 = vmatprep.subr.mxu0 0.0
        %334 = vmatpush1.msra.mxu0 0.0
        %335 = vmatprep.subr.mxu0 0.0
        %336 = vmatpush1.msra.mxu0 0.0
        %337 = vmatprep.mubr.f32.mxu0 0.0
        %338 = vmatmul.mubr.f32.gmra.mrb[0].mxu0 %v266
        %v339 = vpop.f32.mrb[0].mxu0
        %v340 = vadd.f32 %v260, %v339
        %v341 = vpop.f32.mrb[0].mxu0
        %v342 = vadd.f32 %v260, %v341
        %343 = vdwg.mxu0
        %v344 = vxor.u32 %v340, 2147483648
        %v345 = vxor.u32 %v342, 2147483648
        %v346 = vmul.f32 %v344, 1.442695
        %v347 = vpow.pop %v346
        %v348 = vmul.f32 %v345, 1.442695
        %v349 = vpow.pop %v348
        %v350 = vadd.f32 %v347, 1.0
        %v351 = vadd.f32 %v349, 1.0
        %v352 = vrcp.pop %v350
        %v353 = vmul.f32 1.0, %v352
        %v354 = vrcp.pop %v351
        %v355 = vmul.f32 1.0, %v354
        %v356 = vmul.f32 %v340, %v353
        %v357 = vmul.f32 %v342, %v355
        %v360 = vrot.slane %v340, 4
        %v361 = vrot.slane %v342, 4
        %v364 = vmul.f32 %v356, %v360
        %v365 = vmul.f32 %v357, %v361
        %v366 = vld [vmem:[%s3] sm:$0xf]
        %v367 = vld [vmem:[%s4] sm:$0xf]
        %369 = vset.pattern.permute.xlu0 0
        %370 = vperm.xlu0 %369, %v367
        %v371 = vpop.permute.xlu0 %370
        %v374 = vsel %vm264, %v366, 0
        %v377 = vsel %vm268, %v364, 0
        %v380 = vsel %vm268, %v365, 0
        %382 = vmatprep.subr.mxu0 %v380
        %383 = vmatpush1.msra.mxu0 %v377
        %384 = vmatprep.subr.mxu0 0.0
        %385 = vmatpush1.msra.mxu0 0.0
        %386 = vmatprep.subr.mxu0 0.0
        %387 = vmatpush1.msra.mxu0 0.0
        %388 = vmatprep.subr.mxu0 0.0
        %389 = vmatpush1.msra.mxu0 0.0
        %390 = vmatprep.subr.mxu0 0.0
        %391 = vmatpush1.msra.mxu0 0.0
        %392 = vmatprep.subr.mxu0 0.0
        %393 = vmatpush1.msra.mxu0 0.0
        %394 = vmatprep.subr.mxu0 0.0
        %395 = vmatpush1.msra.mxu0 0.0
        %396 = vmatprep.subr.mxu0 0.0
        %397 = vmatpush1.msra.mxu0 0.0
        %398 = vmatprep.subr.mxu0 0.0
        %399 = vmatpush1.msra.mxu0 0.0
        %400 = vmatprep.subr.mxu0 0.0
        %401 = vmatpush1.msra.mxu0 0.0
        %402 = vmatprep.subr.mxu0 0.0
        %403 = vmatpush1.msra.mxu0 0.0
        %404 = vmatprep.subr.mxu0 0.0
        %405 = vmatpush1.msra.mxu0 0.0
        %406 = vmatprep.subr.mxu0 0.0
        %407 = vmatpush1.msra.mxu0 0.0
        %408 = vmatprep.subr.mxu0 0.0
        %409 = vmatpush1.msra.mxu0 0.0
        %410 = vmatprep.subr.mxu0 0.0
        %411 = vmatpush1.msra.mxu0 0.0
        %412 = vmatprep.subr.mxu0 0.0
        %413 = vmatpush1.msra.mxu0 0.0
        %414 = vmatprep.subr.mxu0 0.0
        %415 = vmatpush1.msra.mxu0 0.0
        %416 = vmatprep.subr.mxu0 0.0
        %417 = vmatpush1.msra.mxu0 0.0
        %418 = vmatprep.subr.mxu0 0.0
        %419 = vmatpush1.msra.mxu0 0.0
        %420 = vmatprep.subr.mxu0 0.0
        %421 = vmatpush1.msra.mxu0 0.0
        %422 = vmatprep.subr.mxu0 0.0
        %423 = vmatpush1.msra.mxu0 0.0
        %424 = vmatprep.subr.mxu0 0.0
        %425 = vmatpush1.msra.mxu0 0.0
        %426 = vmatprep.subr.mxu0 0.0
        %427 = vmatpush1.msra.mxu0 0.0
        %428 = vmatprep.subr.mxu0 0.0
        %429 = vmatpush1.msra.mxu0 0.0
        %430 = vmatprep.subr.mxu0 0.0
        %431 = vmatpush1.msra.mxu0 0.0
        %432 = vmatprep.subr.mxu0 0.0
        %433 = vmatpush1.msra.mxu0 0.0
        %434 = vmatprep.subr.mxu0 0.0
        %435 = vmatpush1.msra.mxu0 0.0
        %436 = vmatprep.subr.mxu0 0.0
        %437 = vmatpush1.msra.mxu0 0.0
        %438 = vmatprep.subr.mxu0 0.0
        %439 = vmatpush1.msra.mxu0 0.0
        %440 = vmatprep.subr.mxu0 0.0
        %441 = vmatpush1.msra.mxu0 0.0
        %442 = vmatprep.subr.mxu0 0.0
        %443 = vmatpush1.msra.mxu0 0.0
        %444 = vmatprep.subr.mxu0 0.0
        %445 = vmatpush1.msra.mxu0 0.0
        %446 = vmatprep.mubr.f32.mxu0 0.0
        %447 = vmatmul.mubr.f32.gmra.mrb[0].mxu0 %v374
        %v448 = vpop.f32.mrb[0].mxu0
        %v449 = vadd.f32 %v371, %v448
        %v450 = vpop.f32.mrb[0].mxu0
        %v451 = vadd.f32 %v371, %v450
        %452 = vdwg.mxu0
        %v455 = vcombine.low %v449, %v451
        %457 = vst [vmem:[%s242] sm:$0xff] %v455
        %s458 = sand.u32 %s153, 1
        %s459 = scalar_lea.sflag [#allocation3], %s458
        %s460 = sand.u32 %s153, 1
        %s461 = smul.addr %s460, 8
        %s462 = scalar_lea.vmem [#allocation2], %s461
        // Predicated region
        $region41: #{tpu_custom_call.1} parent=39 // pred_check
          %p463 = pneg %p163
        $region42: #{tpu_custom_call.1} parent=39 // pred_check_branch
          %465 = sbr.rel (%p463) target = $region44
        $region43: #{tpu_custom_call.1} parent=39 // pred_region
          %s466 = smul.u32 2, %s24
          %s468 = ssub.s32 128, 128
          %469 = vsyncadd %s459, %s468
          %s470 = smul.addr %s23, 2
          %s471 = sadd.s32 %s466, %s470
          %s472 = smul.addr %s471, 64
          %s473 = scalar_lea.hbm %s5, %s472
          %s475 = sshll.u32 %s462, 4
          %s476 = int_to_ptr.vmem [resolvable:$true] %s475
          %478 = dma.vmem_to_hbm [thread:$0]  %s476, 128, %s473, %s459
        $region44: #{tpu_custom_call.1} parent=39 // pred_fallthru
          _
      $region40: #{tpu_custom_call.1} parent=5 // pred_fallthru
        _
      %p479 = scmp.le.s32.totalorder 2, %s14
      // Predicated region
      $region45: #{tpu_custom_call.1} parent=5 // pred_check
        %p480 = pneg %p479
      $region46: #{tpu_custom_call.1} parent=5 // pred_check_branch
        %482 = sbr.rel (%p480) target = $region48
      $region47: #{tpu_custom_call.1} parent=5 // pred_region
        %s483 = ssub.s32 %s14, 2
        // Predicated region
        $region49: #{tpu_custom_call.1} parent=47 // pred_check
          %p484 = pneg %p169
        $region50: #{tpu_custom_call.1} parent=47 // pred_check_branch
          %486 = sbr.rel (%p484) target = $region52
        $region51: #{tpu_custom_call.1} parent=47 // pred_region
          %s487 = sand.u32 %s154, 1
          %s488 = scalar_lea.sflag [#allocation3], %s487
          %s489 = sand.u32 %s154, 1
          %s490 = smul.addr %s489, 8
          %s491 = scalar_lea.vmem [#allocation2], %s490
          %492 = dma.done %s488, 128
        $region52: #{tpu_custom_call.1} parent=47 // pred_fallthru
          _
      $region48: #{tpu_custom_call.1} parent=5 // pred_fallthru
        _
    $region6: #{tpu_custom_call.1} parent=1 // loop_footer
      %s18 = sadd.s32 1, %s14
    $region7: #{tpu_custom_call.1} parent=1 // loop_footer_branch
      %13 = sbr.rel target = $region3
    $region8: #{tpu_custom_call.1} parent=1 // loop_exit
      _
    %493 = vsyncpa [#allocation3], 1
    %s494 = scalar_lea.sflag [#allocation3], 1
    %495 = vsyncpa %s494, 1

// kernel: tpu_custom_call.1
$region0: #{tpu_custom_call.1}
  #allocation0 [shape = 'u32[]', space=smem, size = 0x4, offset = 0x4, fixed_abs, tag = 'smem constant byte address 0x4 - core index']
  #allocation1 [shape = 'u32[144,128]{1,0:T(1,128)}', space=vmem, size = 0x12000, scoped, tag = 'internal scratch']
  %s0 = inlined_call_operand.vmem [shape: f32[2,4,256], index: 0, kind: input, shape index: {}]
  %s1 = inlined_call_operand.vmem [shape: f32[8,4], index: 1, kind: input, shape index: {}]
  %s2 = inlined_call_operand.vmem [shape: f32[8,1], index: 2, kind: input, shape index: {}]
  %s3 = inlined_call_operand.vmem [shape: f32[4,4], index: 3, kind: input, shape index: {}]
  %s4 = inlined_call_operand.vmem [shape: f32[4,1], index: 4, kind: input, shape index: {}]
  %s5 = inlined_call_operand.hbm [shape: f32[2,4,256], index: 5, kind: output, shape index: {}]
  %s6 = sld [smem:[#allocation0]]
  $region53: #{tpu_custom_call.1} parent=0
    _
  %s8 = ssub.s32 1, %s6
  %s9 = scalar_select 0, %s8, %s6
  $region1: #{tpu_custom_call.1} parent=0
    #allocation2 [shape = 'u8[8192]{0}', space=vmem, size = 0x2000, scoped, tag = 'output window, operand 0']
    #allocation3 [shape = 's32[2]{0}', space=sflag, size = 0x8, scoped, tag = 'scoped memory for tpu_custom_call.1']
    %10 = vsyncpa [#allocation3], 0
    %s11 = scalar_lea.sflag [#allocation3], 1
    %12 = vsyncpa %s11, 0
    loop: start=0, step=1, limit=4
    $region2: #{tpu_custom_call.1} parent=1 // loop_pre_header
      _
    $region3: #{tpu_custom_call.1} parent=1 // loop_header
      %s14 = sphi 0, %s18
      %p15 = scmp.ge.s32.totalorder %s14, 4
      %s21 = sphi 0, %s33
      %s22 = sphi 0, %s29
      %s23 = sphi 0, %s21
      %s24 = sphi 0, %s22
      %s25 = sphi 0, %s23
      %s26 = sphi 0, %s24
      %s38 = sphi 0, %s40
      %s41 = sphi 0, %s38
      %s42 = sphi 0, %s41
      %s58 = sphi 0, %s42
      %s62 = sphi 0, %s62
      %s64 = sphi 0, %s62
      %s65 = sphi 0, %s64
      %s79 = sphi 0, %s65
      %s83 = sphi 0, %s83
      %s85 = sphi 0, %s83
      %s86 = sphi 0, %s85
      %s100 = sphi 0, %s86
      %s104 = sphi 0, %s104
      %s106 = sphi 0, %s104
      %s107 = sphi 0, %s106
      %s121 = sphi 0, %s107
      %s125 = sphi 0, %s125
      %s127 = sphi 0, %s125
      %s128 = sphi 0, %s127
      %s142 = sphi 0, %s128
      %s150 = sphi 0, %s152
      %s153 = sphi 0, %s150
      %s154 = sphi 0, %s153
      %s170 = sphi 0, %s154
    $region4: #{tpu_custom_call.1} parent=1 // loop_header_branch
      %17 = sbr.rel (%p15) target = $region8
    $region5: #{tpu_custom_call.1} parent=1 // loop_body
      %s19 = ssub.s32 %s14, 1
      %s20 = ssub.s32 %s14, 2
      %s27 = sadd.s32 1, %s22
      %p28 = scmp.ge.s32.totalorder %s27, 1
      %s29 = scalar_select %p28, 0, %s27
      %s30 = sadd.s32 1, %s21
      %s31 = scalar_select %p28, %s30, %s21
      %p32 = scmp.ge.s32.totalorder %s31, 2
      %s33 = scalar_select %p32, 0, %s31
      %s34 = ssub.s32 %s21, %s33
      %s35 = ssub.s32 %s22, %s29
      %s36 = sor.u32 %s34, %s35
      %p37 = scmp.eq.s32.totalorder %s36, 0
      %s39 = sadd.s32 %s38, 1
      %s40 = scalar_select %p37, %s38, %s39
      %p43 = pneg %p37
      %p44 = scmp.eq.s32.totalorder %s14, 1
      %p45 = por %p43, %p44
      %p46 = scmp.ne.s32.totalorder %s38, %s41
      %p47 = scmp.eq.s32.totalorder %s14, 0
      %p48 = por %p46, %p47
      %p49 = scmp.ne.s32.totalorder %s38, %s41
      %p50 = scmp.eq.s32.totalorder %s19, 1
      %p51 = por %p49, %p50
      %p52 = scmp.ne.s32.totalorder %s41, %s42
      %p53 = scmp.eq.s32.totalorder %s19, 0
      %p54 = por %p52, %p53
      %p55 = scmp.ne.s32.totalorder %s41, %s42
      %p56 = scmp.eq.s32.totalorder %s20, 1
      %p57 = por %p55, %p56
      %p59 = scmp.ne.s32.totalorder %s42, %s58
      %p60 = scmp.eq.s32.totalorder %s20, 0
      %p61 = por %p59, %p60
      %s63 = sadd.s32 %s62, 1
      %p66 = scmp.eq.s32.totalorder %s14, 1
      %p67 = scmp.ne.s32.totalorder %s62, %s64
      %p68 = scmp.eq.s32.totalorder %s14, 0
      %p69 = por %p67, %p68
      %p70 = scmp.ne.s32.totalorder %s62, %s64
      %p71 = scmp.eq.s32.totalorder %s19, 1
      %p72 = por %p70, %p71
      %p73 = scmp.ne.s32.totalorder %s64, %s65
      %p74 = scmp.eq.s32.totalorder %s19, 0
      %p75 = por %p73, %p74
      %p76 = scmp.ne.s32.totalorder %s64, %s65
      %p77 = scmp.eq.s32.totalorder %s20, 1
      %p78 = por %p76, %p77
      %p80 = scmp.ne.s32.totalorder %s65, %s79
      %p81 = scmp.eq.s32.totalorder %s20, 0
      %p82 = por %p80, %p81
      %s84 = sadd.s32 %s83, 1
      %p87 = scmp.eq.s32.totalorder %s14, 1
      %p88 = scmp.ne.s32.totalorder %s83, %s85
      %p89 = scmp.eq.s32.totalorder %s14, 0
      %p90 = por %p88, %p89
      %p91 = scmp.ne.s32.totalorder %s83, %s85
      %p92 = scmp.eq.s32.totalorder %s19, 1
      %p93 = por %p91, %p92
      %p94 = scmp.ne.s32.totalorder %s85, %s86
      %p95 = scmp.eq.s32.totalorder %s19, 0
      %p96 = por %p94, %p95
      %p97 = scmp.ne.s32.totalorder %s85, %s86
      %p98 = scmp.eq.s32.totalorder %s20, 1
      %p99 = por %p97, %p98
      %p101 = scmp.ne.s32.totalorder %s86, %s100
      %p102 = scmp.eq.s32.totalorder %s20, 0
      %p103 = por %p101, %p102
      %s105 = sadd.s32 %s104, 1
      %p108 = scmp.eq.s32.totalorder %s14, 1
      %p109 = scmp.ne.s32.totalorder %s104, %s106
      %p110 = scmp.eq.s32.totalorder %s14, 0
      %p111 = por %p109, %p110
      %p112 = scmp.ne.s32.totalorder %s104, %s106
      %p113 = scmp.eq.s32.totalorder %s19, 1
      %p114 = por %p112, %p113
      %p115 = scmp.ne.s32.totalorder %s106, %s107
      %p116 = scmp.eq.s32.totalorder %s19, 0
      %p117 = por %p115, %p116
      %p118 = scmp.ne.s32.totalorder %s106, %s107
      %p119 = scmp.eq.s32.totalorder %s20, 1
      %p120 = por %p118, %p119
      %p122 = scmp.ne.s32.totalorder %s107, %s121
      %p123 = scmp.eq.s32.totalorder %s20, 0
      %p124 = por %p122, %p123
      %s126 = sadd.s32 %s125, 1
      %p129 = scmp.eq.s32.totalorder %s14, 1
      %p130 = scmp.ne.s32.totalorder %s125, %s127
      %p131 = scmp.eq.s32.totalorder %s14, 0
      %p132 = por %p130, %p131
      %p133 = scmp.ne.s32.totalorder %s125, %s127
      %p134 = scmp.eq.s32.totalorder %s19, 1
      %p135 = por %p133, %p134
      %p136 = scmp.ne.s32.totalorder %s127, %s128
      %p137 = scmp.eq.s32.totalorder %s19, 0
      %p138 = por %p136, %p137
      %p139 = scmp.ne.s32.totalorder %s127, %s128
      %p140 = scmp.eq.s32.totalorder %s20, 1
      %p141 = por %p139, %p140
      %p143 = scmp.ne.s32.totalorder %s128, %s142
      %p144 = scmp.eq.s32.totalorder %s20, 0
      %p145 = por %p143, %p144
      %s146 = ssub.s32 %s21, %s33
      %s147 = ssub.s32 %s22, %s29
      %s148 = sor.u32 %s146, %s147
      %p149 = scmp.eq.s32.totalorder %s148, 0
      %s151 = sadd.s32 %s150, 1
      %s152 = scalar_select %p149, %s150, %s151
      %p155 = pneg %p149
      %p156 = scmp.eq.s32.totalorder %s14, 1
      %p157 = por %p155, %p156
      %p158 = scmp.ne.s32.totalorder %s150, %s153
      %p159 = scmp.eq.s32.totalorder %s14, 0
      %p160 = por %p158, %p159
      %p161 = scmp.ne.s32.totalorder %s150, %s153
      %p162 = scmp.eq.s32.totalorder %s19, 1
      %p163 = por %p161, %p162
      %p164 = scmp.ne.s32.totalorder %s153, %s154
      %p165 = scmp.eq.s32.totalorder %s19, 0
      %p166 = por %p164, %p165
      %p167 = scmp.ne.s32.totalorder %s153, %s154
      %p168 = scmp.eq.s32.totalorder %s20, 1
      %p169 = por %p167, %p168
      %p171 = scmp.ne.s32.totalorder %s154, %s170
      %p172 = scmp.eq.s32.totalorder %s20, 0
      %p173 = por %p171, %p172
      %p174 = scmp.le.s32.totalorder 1, %s14
      %p175 = scmp.lt.s32.totalorder %s14, 3
      %p176 = pnand %p174, %p175
      %p177 = pneg %p176
      // Predicated region
      $region9: #{tpu_custom_call.1} parent=5 // pred_check
        _
      $region10: #{tpu_custom_call.1} parent=5 // pred_check_branch
        %179 = sbr.rel (%p176) target = $region12
      $region11: #{tpu_custom_call.1} parent=5 // pred_region
        %s180 = ssub.s32 %s14, 1
        // Predicated region
        $region13: #{tpu_custom_call.1} parent=11 // pred_check
          %p181 = pneg %p75
        $region14: #{tpu_custom_call.1} parent=11 // pred_check_branch
          %183 = sbr.rel (%p181) target = $region16
        $region15: #{tpu_custom_call.1} parent=11 // pred_region
          _
        $region16: #{tpu_custom_call.1} parent=11 // pred_fallthru
          _
        // Predicated region
        $region17: #{tpu_custom_call.1} parent=11 // pred_check
          %p184 = pneg %p96
        $region18: #{tpu_custom_call.1} parent=11 // pred_check_branch
          %186 = sbr.rel (%p184) target = $region20
        $region19: #{tpu_custom_call.1} parent=11 // pred_region
          _
        $region20: #{tpu_custom_call.1} parent=11 // pred_fallthru
          _
        // Predicated region
        $region21: #{tpu_custom_call.1} parent=11 // pred_check
          %p187 = pneg %p117
        $region22: #{tpu_custom_call.1} parent=11 // pred_check_branch
          %189 = sbr.rel (%p187) target = $region24
        $region23: #{tpu_custom_call.1} parent=11 // pred_region
          _
        $region24: #{tpu_custom_call.1} parent=11 // pred_fallthru
          _
        // Predicated region
        $region25: #{tpu_custom_call.1} parent=11 // pred_check
          %p190 = pneg %p138
        $region26: #{tpu_custom_call.1} parent=11 // pred_check_branch
          %192 = sbr.rel (%p190) target = $region28
        $region27: #{tpu_custom_call.1} parent=11 // pred_region
          _
        $region28: #{tpu_custom_call.1} parent=11 // pred_fallthru
          _
      $region12: #{tpu_custom_call.1} parent=5 // pred_fallthru
        _
      %p193 = scmp.lt.s32.totalorder %s14, 2
      // Predicated region
      $region29: #{tpu_custom_call.1} parent=5 // pred_check
        %p194 = pneg %p193
      $region30: #{tpu_custom_call.1} parent=5 // pred_check_branch
        %196 = sbr.rel (%p194) target = $region32
      $region31: #{tpu_custom_call.1} parent=5 // pred_region
        // Predicated region
        $region33: #{tpu_custom_call.1} parent=31 // pred_check
          %p197 = pneg %p48
        $region34: #{tpu_custom_call.1} parent=31 // pred_check_branch
          %199 = sbr.rel (%p197) target = $region36
        $region35: #{tpu_custom_call.1} parent=31 // pred_region
          %s200 = smul.u32 2, %s22
          %p201 = scmp.lt.s32.totalorder %s21, 1
          %s202 = scalar_select %p201, %s21, 1
          %p203 = scmp.lt.s32.totalorder %s200, 1
          %s204 = scalar_select %p203, %s200, 1
          %s205 = smul.addr %s202, 2
          %s206 = sadd.s32 %s204, %s205
          %s207 = smul.addr %s206, 4
          %s208 = scalar_lea.vmem %s0, %s207
          %s209 = smul.u32 2, %s22
        $region36: #{tpu_custom_call.1} parent=31 // pred_fallthru
          _
      $region32: #{tpu_custom_call.1} parent=5 // pred_fallthru
        _
      %p210 = scmp.le.s32.totalorder 1, %s14
      %p211 = scmp.lt.s32.totalorder %s14, 3
      %p212 = pnand %p210, %p211
      %p213 = pneg %p212
      // Predicated region
      $region37: #{tpu_custom_call.1} parent=5 // pred_check
        _
      $region38: #{tpu_custom_call.1} parent=5 // pred_check_branch
        %215 = sbr.rel (%p212) target = $region40
      $region39: #{tpu_custom_call.1} parent=5 // pred_region
        %s216 = ssub.s32 %s14, 1
        %s217 = smul.u32 2, %s24
        %p218 = scmp.lt.s32.totalorder %s23, 1
        %s219 = scalar_select %p218, %s23, 1
        %p220 = scmp.lt.s32.totalorder %s217, 1
        %s221 = scalar_select %p220, %s217, 1
        %s222 = smul.addr %s219, 2
        %s223 = sadd.s32 %s221, %s222
        %s224 = smul.addr %s223, 4
        %s225 = scalar_lea.vmem %s0, %s224
        %p226 = pneg %p54
        %p227 = pneg %p51
        %p228 = pneg %p75
        %p229 = pneg %p72
        %p230 = pneg %p96
        %p231 = pneg %p93
        %p232 = pneg %p117
        %p233 = pneg %p114
        %p234 = pneg %p138
        %p235 = pneg %p135
        %p236 = pneg %p166
        %p237 = pneg %p163
        %s238 = sand.u32 %s153, 1
        %s239 = scalar_lea.sflag [#allocation3], %s238
        %s240 = sand.u32 %s153, 1
        %s241 = smul.addr %s240, 8
        %s242 = scalar_lea.vmem [#allocation2], %s241
        %s243 = smul.u32 2, %s24
        %p244 = scmp.lt.s32.totalorder %s23, 1
        %s245 = scalar_select %p244, %s23, 1
        %p246 = scmp.lt.s32.totalorder %s243, 1
        %s247 = scalar_select %p246, %s243, 1
        %s248 = smul.addr %s245, 2
        %s249 = sadd.s32 %s247, %s248
        %s250 = smul.addr %s249, 4
        %s251 = scalar_lea.vmem %s0, %s250
        %s252 = smul.u32 2, %s24
        %s253 = smul.u32 2, %s24
        %v254 = vld [vmem:[%s251] sm:$0xff]
        %v255 = vld [vmem:[%s1] sm:$0xff]
        %v256 = vld [vmem:[%s2] sm:$0xff]
        %258 = vset.pattern.permute.xlu0 0
        %259 = vperm.xlu0 %258, %v256
        %v260 = vpop.permute.xlu0 %259
        %v263 = vcombine.high %v254, %v254
        %vm264 = vcmask 31744
        %v266 = vsel %vm264, %v255, 0
        %vm268 = vcmask 1043456
        %v269 = vsel %vm268, %v254, 0
        %v271 = vsel %vm268, %v263, 0
        %273 = vmatprep.subr.mxu0 %v271
        %274 = vmatpush1.msra.mxu0 %v269
        %275 = vmatprep.subr.mxu0 0.0
        %276 = vmatpush1.msra.mxu0 0.0
        %277 = vmatprep.subr.mxu0 0.0
        %278 = vmatpush1.msra.mxu0 0.0
        %279 = vmatprep.subr.mxu0 0.0
        %280 = vmatpush1.msra.mxu0 0.0
        %281 = vmatprep.subr.mxu0 0.0
        %282 = vmatpush1.msra.mxu0 0.0
        %283 = vmatprep.subr.mxu0 0.0
        %284 = vmatpush1.msra.mxu0 0.0
        %285 = vmatprep.subr.mxu0 0.0
        %286 = vmatpush1.msra.mxu0 0.0
        %287 = vmatprep.subr.mxu0 0.0
        %288 = vmatpush1.msra.mxu0 0.0
        %289 = vmatprep.subr.mxu0 0.0
        %290 = vmatpush1.msra.mxu0 0.0
        %291 = vmatprep.subr.mxu0 0.0
        %292 = vmatpush1.msra.mxu0 0.0
        %293 = vmatprep.subr.mxu0 0.0
        %294 = vmatpush1.msra.mxu0 0.0
        %295 = vmatprep.subr.mxu0 0.0
        %296 = vmatpush1.msra.mxu0 0.0
        %297 = vmatprep.subr.mxu0 0.0
        %298 = vmatpush1.msra.mxu0 0.0
        %299 = vmatprep.subr.mxu0 0.0
        %300 = vmatpush1.msra.mxu0 0.0
        %301 = vmatprep.subr.mxu0 0.0
        %302 = vmatpush1.msra.mxu0 0.0
        %303 = vmatprep.subr.mxu0 0.0
        %304 = vmatpush1.msra.mxu0 0.0
        %305 = vmatprep.subr.mxu0 0.0
        %306 = vmatpush1.msra.mxu0 0.0
        %307 = vmatprep.subr.mxu0 0.0
        %308 = vmatpush1.msra.mxu0 0.0
        %309 = vmatprep.subr.mxu0 0.0
        %310 = vmatpush1.msra.mxu0 0.0
        %311 = vmatprep.subr.mxu0 0.0
        %312 = vmatpush1.msra.mxu0 0.0
        %313 = vmatprep.subr.mxu0 0.0
        %314 = vmatpush1.msra.mxu0 0.0
        %315 = vmatprep.subr.mxu0 0.0
        %316 = vmatpush1.msra.mxu0 0.0
        %317 = vmatprep.subr.mxu0 0.0
        %318 = vmatpush1.msra.mxu0 0.0
        %319 = vmatprep.subr.mxu0 0.0
        %320 = vmatpush1.msra.mxu0 0.0
        %321 = vmatprep.subr.mxu0 0.0
        %322 = vmatpush1.msra.mxu0 0.0
        %323 = vmatprep.subr.mxu0 0.0
        %324 = vmatpush1.msra.mxu0 0.0
        %325 = vmatprep.subr.mxu0 0.0
        %326 = vmatpush1.msra.mxu0 0.0
        %327 = vmatprep.subr.mxu0 0.0
        %328 = vmatpush1.msra.mxu0 0.0
        %329 = vmatprep.subr.mxu0 0.0
        %330 = vmatpush1.msra.mxu0 0.0
        %331 = vmatprep.subr.mxu0 0.0
        %332 = vmatpush1.msra.mxu0 0.0
        %333 = vmatprep.subr.mxu0 0.0
        %334 = vmatpush1.msra.mxu0 0.0
        %335 = vmatprep.subr.mxu0 0.0
        %336 = vmatpush1.msra.mxu0 0.0
        %337 = vmatprep.mubr.f32.mxu0 0.0
        %338 = vmatmul.mubr.f32.gmra.mrb[0].mxu0 %v266
        %v339 = vpop.f32.mrb[0].mxu0
        %v340 = vadd.f32 %v260, %v339
        %v341 = vpop.f32.mrb[0].mxu0
        %v342 = vadd.f32 %v260, %v341
        %343 = vdwg.mxu0
        %v344 = vxor.u32 %v340, 2147483648
        %v345 = vxor.u32 %v342, 2147483648
        %v346 = vmul.f32 %v344, 1.442695
        %v347 = vpow.pop %v346
        %v348 = vmul.f32 %v345, 1.442695
        %v349 = vpow.pop %v348
        %v350 = vadd.f32 %v347, 1.0
        %v351 = vadd.f32 %v349, 1.0
        %v352 = vrcp.pop %v350
        %v353 = vmul.f32 1.0, %v352
        %v354 = vrcp.pop %v351
        %v355 = vmul.f32 1.0, %v354
        %v356 = vmul.f32 %v340, %v353
        %v357 = vmul.f32 %v342, %v355
        %v360 = vrot.slane %v340, 4
        %v361 = vrot.slane %v342, 4
        %v364 = vmul.f32 %v356, %v360
        %v365 = vmul.f32 %v357, %v361
        %v366 = vld [vmem:[%s3] sm:$0xf]
        %v367 = vld [vmem:[%s4] sm:$0xf]
        %369 = vset.pattern.permute.xlu0 0
        %370 = vperm.xlu0 %369, %v367
        %v371 = vpop.permute.xlu0 %370
        %v374 = vsel %vm264, %v366, 0
        %v377 = vsel %vm268, %v364, 0
        %v380 = vsel %vm268, %v365, 0
        %382 = vmatprep.subr.mxu0 %v380
        %383 = vmatpush1.msra.mxu0 %v377
        %384 = vmatprep.subr.mxu0 0.0
        %385 = vmatpush1.msra.mxu0 0.0
        %386 = vmatprep.subr.mxu0 0.0
        %387 = vmatpush1.msra.mxu0 0.0
        %388 = vmatprep.subr.mxu0 0.0
        %389 = vmatpush1.msra.mxu0 0.0
        %390 = vmatprep.subr.mxu0 0.0
        %391 = vmatpush1.msra.mxu0 0.0
        %392 = vmatprep.subr.mxu0 0.0
        %393 = vmatpush1.msra.mxu0 0.0
        %394 = vmatprep.subr.mxu0 0.0
        %395 = vmatpush1.msra.mxu0 0.0
        %396 = vmatprep.subr.mxu0 0.0
        %397 = vmatpush1.msra.mxu0 0.0
        %398 = vmatprep.subr.mxu0 0.0
        %399 = vmatpush1.msra.mxu0 0.0
        %400 = vmatprep.subr.mxu0 0.0
        %401 = vmatpush1.msra.mxu0 0.0
        %402 = vmatprep.subr.mxu0 0.0
        %403 = vmatpush1.msra.mxu0 0.0
        %404 = vmatprep.subr.mxu0 0.0
        %405 = vmatpush1.msra.mxu0 0.0
        %406 = vmatprep.subr.mxu0 0.0
        %407 = vmatpush1.msra.mxu0 0.0
        %408 = vmatprep.subr.mxu0 0.0
        %409 = vmatpush1.msra.mxu0 0.0
        %410 = vmatprep.subr.mxu0 0.0
        %411 = vmatpush1.msra.mxu0 0.0
        %412 = vmatprep.subr.mxu0 0.0
        %413 = vmatpush1.msra.mxu0 0.0
        %414 = vmatprep.subr.mxu0 0.0
        %415 = vmatpush1.msra.mxu0 0.0
        %416 = vmatprep.subr.mxu0 0.0
        %417 = vmatpush1.msra.mxu0 0.0
        %418 = vmatprep.subr.mxu0 0.0
        %419 = vmatpush1.msra.mxu0 0.0
        %420 = vmatprep.subr.mxu0 0.0
        %421 = vmatpush1.msra.mxu0 0.0
        %422 = vmatprep.subr.mxu0 0.0
        %423 = vmatpush1.msra.mxu0 0.0
        %424 = vmatprep.subr.mxu0 0.0
        %425 = vmatpush1.msra.mxu0 0.0
        %426 = vmatprep.subr.mxu0 0.0
        %427 = vmatpush1.msra.mxu0 0.0
        %428 = vmatprep.subr.mxu0 0.0
        %429 = vmatpush1.msra.mxu0 0.0
        %430 = vmatprep.subr.mxu0 0.0
        %431 = vmatpush1.msra.mxu0 0.0
        %432 = vmatprep.subr.mxu0 0.0
        %433 = vmatpush1.msra.mxu0 0.0
        %434 = vmatprep.subr.mxu0 0.0
        %435 = vmatpush1.msra.mxu0 0.0
        %436 = vmatprep.subr.mxu0 0.0
        %437 = vmatpush1.msra.mxu0 0.0
        %438 = vmatprep.subr.mxu0 0.0
        %439 = vmatpush1.msra.mxu0 0.0
        %440 = vmatprep.subr.mxu0 0.0
        %441 = vmatpush1.msra.mxu0 0.0
        %442 = vmatprep.subr.mxu0 0.0
        %443 = vmatpush1.msra.mxu0 0.0
        %444 = vmatprep.subr.mxu0 0.0
        %445 = vmatpush1.msra.mxu0 0.0
        %446 = vmatprep.mubr.f32.mxu0 0.0
        %447 = vmatmul.mubr.f32.gmra.mrb[0].mxu0 %v374
        %v448 = vpop.f32.mrb[0].mxu0
        %v449 = vadd.f32 %v371, %v448
        %v450 = vpop.f32.mrb[0].mxu0
        %v451 = vadd.f32 %v371, %v450
        %452 = vdwg.mxu0
        %v455 = vcombine.low %v449, %v451
        %457 = vst [vmem:[%s242] sm:$0xff] %v455
        %s458 = sand.u32 %s153, 1
        %s459 = scalar_lea.sflag [#allocation3], %s458
        %s460 = sand.u32 %s153, 1
        %s461 = smul.addr %s460, 8
        %s462 = scalar_lea.vmem [#allocation2], %s461
        // Predicated region
        $region41: #{tpu_custom_call.1} parent=39 // pred_check
          %p463 = pneg %p163
        $region42: #{tpu_custom_call.1} parent=39 // pred_check_branch
          %465 = sbr.rel (%p463) target = $region44
        $region43: #{tpu_custom_call.1} parent=39 // pred_region
          %s466 = smul.u32 2, %s24
          %s468 = ssub.s32 128, 128
          %469 = vsyncadd %s459, %s468
          %s470 = smul.addr %s23, 2
          %s471 = sadd.s32 %s466, %s470
          %s472 = smul.addr %s471, 64
          %s473 = scalar_lea.hbm %s5, %s472
          %s475 = sshll.u32 %s462, 4
          %s476 = int_to_ptr.vmem [resolvable:$true] %s475
          %478 = dma.vmem_to_hbm [thread:$0]  %s476, 128, %s473, %s459
        $region44: #{tpu_custom_call.1} parent=39 // pred_fallthru
          _
      $region40: #{tpu_custom_call.1} parent=5 // pred_fallthru
        _
      %p479 = scmp.le.s32.totalorder 2, %s14
      // Predicated region
      $region45: #{tpu_custom_call.1} parent=5 // pred_check
        %p480 = pneg %p479
      $region46: #{tpu_custom_call.1} parent=5 // pred_check_branch
        %482 = sbr.rel (%p480) target = $region48
      $region47: #{tpu_custom_call.1} parent=5 // pred_region
        %s483 = ssub.s32 %s14, 2
        // Predicated region
        $region49: #{tpu_custom_call.1} parent=47 // pred_check
          %p484 = pneg %p169
        $region50: #{tpu_custom_call.1} parent=47 // pred_check_branch
          %486 = sbr.rel (%p484) target = $region52
        $region51: #{tpu_custom_call.1} parent=47 // pred_region
          %s487 = sand.u32 %s154, 1
          %s488 = scalar_lea.sflag [#allocation3], %s487
          %s489 = sand.u32 %s154, 1
          %s490 = smul.addr %s489, 8
          %s491 = scalar_lea.vmem [#allocation2], %s490
          %492 = dma.done %s488, 128
        $region52: #{tpu_custom_call.1} parent=47 // pred_fallthru
          _
      $region48: #{tpu_custom_call.1} parent=5 // pred_fallthru
        _
    $region6: #{tpu_custom_call.1} parent=1 // loop_footer
      %s18 = sadd.s32 1, %s14
    $region7: #{tpu_custom_call.1} parent=1 // loop_footer_branch
      %13 = sbr.rel target = $region3
    $region8: #{tpu_custom_call.1} parent=1 // loop_exit
      _
    %493 = vsyncpa [#allocation3], 1
    %s494 = scalar_lea.sflag [#allocation3], 1
    %495 = vsyncpa %s494, 1

</llo_original>
